<compile_context>
chip_gen: v6e
topology: v6e:2x2x1
jax: 0.10.0
libtpu: 0.0.40
codegen_flags: <defaults>
</compile_context>

<pallas_src>
import jax
import jax.numpy as jnp
from jax.experimental import pallas as pl
from jax.experimental.pallas import tpu as pltpu

_LANE = 128
_DEFAULT_VMEM_BUDGET = 32 * 1024 * 1024  # safe scoped-VMEM target on v5e/v6e/v7x


def _round_up(x, m):
    return (x + m - 1) // m * m


# --------------------------------------------------------------------------- #
# MXU path: C >= 128, channels-last (tm, C) tiles.
# --------------------------------------------------------------------------- #
def _gate_kernel_mxu(x_ref, g_ref, wt_ref, wp_ref, btp_ref, wpsi_ref, bpsi_ref,
                     o_ref):
    x = x_ref[...]
    g = g_ref[...]
    mm_dtype = wt_ref.dtype
    # theta(x) + phi(g): two MXU dots accumulated in f32 with one fused bias.
    s = jnp.dot(x.astype(mm_dtype), wt_ref[...],
                preferred_element_type=jnp.float32)
    s = s + jnp.dot(g.astype(mm_dtype), wp_ref[...],
                    preferred_element_type=jnp.float32)
    s = jax.nn.sigmoid(s + btp_ref[...])
    psi = jnp.dot(s.astype(mm_dtype), wpsi_ref[...],
                  preferred_element_type=jnp.float32) + bpsi_ref[...]
    o_ref[...] = (x.astype(jnp.float32) * psi).astype(o_ref.dtype)


def _gate_mxu(x, g, wt, wp, bt, bp, wpsi, bpsi, *, tm, vmem_budget_bytes,
              matmul_dtype):
    N, H, W, C = x.shape
    M = N * H * W
    out_dtype = x.dtype
    mm_dtype = jnp.dtype(matmul_dtype) if matmul_dtype is not None else jnp.dtype(x.dtype)

    # Pre-transpose weights -> (C_in, C_out); fuse theta/phi biases (f32).
    wt_t = wt.T.astype(mm_dtype)
    wp_t = wp.T.astype(mm_dtype)
    wpsi_t = wpsi.T.astype(mm_dtype)
    b_tp = (bt.astype(jnp.float32) + bp.astype(jnp.float32)).reshape(1, C)
    b_psi = bpsi.astype(jnp.float32).reshape(1, C)

    item = jnp.dtype(out_dtype).itemsize
    w_item = jnp.dtype(mm_dtype).itemsize
    if tm is None:
        # Resident weights/biases are auto-double-buffered by the pipeline.
        weight_bytes = 2 * (3 * C * C * w_item + 2 * C * 4)
        stream_bytes_per_row = 3 * 2 * C * item          # x, g, out; 2 buffers each
        budget = max(vmem_budget_bytes - weight_bytes, 256 * stream_bytes_per_row)
        tm = max(256, (budget // stream_bytes_per_row // 256) * 256)
        tm = min(tm, 2048)
    else:
        tm = _round_up(tm, 256)
    tm = min(tm, _round_up(M, 256))      # don't over-pad tiny problems

    M_pad = _round_up(M, tm)
    x_flat = x.reshape(M, C)
    g_flat = g.reshape(M, C)
    if M_pad != M:
        pad = ((0, M_pad - M), (0, 0))
        x_flat = jnp.pad(x_flat, pad)
        g_flat = jnp.pad(g_flat, pad)

    grid = (M_pad // tm,)
    row_spec = pl.BlockSpec((tm, C), lambda i: (i, 0))
    w_spec = pl.BlockSpec((C, C), lambda i: (0, 0))
    b_spec = pl.BlockSpec((1, C), lambda i: (0, 0))

    cost = pl.CostEstimate(
        flops=6 * M_pad * C * C,
        transcendentals=M_pad * C,
        bytes_accessed=3 * M_pad * C * item + 3 * C * C * w_item,
    )

    out_flat = pl.pallas_call(
        _gate_kernel_mxu,
        out_shape=jax.ShapeDtypeStruct((M_pad, C), out_dtype),
        grid_spec=pltpu.PrefetchScalarGridSpec(
            num_scalar_prefetch=0,
            grid=grid,
            in_specs=[row_spec, row_spec, w_spec, w_spec, b_spec, w_spec, b_spec],
            out_specs=row_spec,
        ),
        compiler_params=pltpu.CompilerParams(
            dimension_semantics=("parallel",),
            vmem_limit_bytes=vmem_budget_bytes,
        ),
        cost_estimate=cost,
    )(x_flat, g_flat, wt_t, wp_t, b_tp, wpsi_t, b_psi)

    return out_flat[:M].reshape(N, H, W, C)


# --------------------------------------------------------------------------- #
# Small-C VPU path: C < 128, channels-first (C, tm_px) tiles (pixels on lanes).
# --------------------------------------------------------------------------- #
def _gate_kernel_small_c(x_ref, g_ref, wt_ref, wp_ref, btp_ref, wpsi_ref,
                         bpsi_ref, o_ref):
    x = x_ref[...].astype(jnp.float32)       # (C, npix)
    g = g_ref[...].astype(jnp.float32)
    wt = wt_ref[...]                          # (C_out, C_in)
    wp = wp_ref[...]
    wpsi = wpsi_ref[...]
    C, npix = x.shape
    ones = jnp.ones((1, npix), jnp.float32)

    # theta(x) + phi(g) + (bt + bp): unrolled VPU broadcast-FMAs over C_in.
    s = btp_ref[...] * ones                   # (C,1)*(1,npix) -> (C,npix)
    for ci in range(C):
        s = s + wt[:, ci:ci + 1] * x[ci:ci + 1, :]
        s = s + wp[:, ci:ci + 1] * g[ci:ci + 1, :]
    s = jax.nn.sigmoid(s)

    psi = bpsi_ref[...] * ones
    for ci in range(C):
        psi = psi + wpsi[:, ci:ci + 1] * s[ci:ci + 1, :]

    o_ref[...] = (x * psi).astype(o_ref.dtype)


def _gate_small_c(x, g, wt, wp, bt, bp, wpsi, bpsi, *, tm, vmem_budget_bytes):
    N, H, W, C = x.shape
    M = N * H * W
    out_dtype = x.dtype

    # Channels-first layout: pixels on the 128-lane axis => dense loads/stores.
    x_cf = x.reshape(M, C).T                  # (C, M)  (layout plumbing in XLA)
    g_cf = g.reshape(M, C).T

    wt32 = wt.astype(jnp.float32)
    wp32 = wp.astype(jnp.float32)
    wpsi32 = wpsi.astype(jnp.float32)
    b_tp = (bt.astype(jnp.float32) + bp.astype(jnp.float32)).reshape(C, 1)
    b_psi = bpsi.astype(jnp.float32).reshape(C, 1)

    item = jnp.dtype(out_dtype).itemsize
    if tm is None:
        stream_bytes_per_px = 3 * 2 * C * item    # x, g, out; double-buffered
        tm = (vmem_budget_bytes // 2) // stream_bytes_per_px  # headroom for temps
        tm = max(_LANE, (tm // _LANE) * _LANE)
        tm = min(tm, 32768)
    else:
        tm = _round_up(tm, _LANE)
    tm = min(tm, _round_up(M, _LANE))

    M_pad = _round_up(M, tm)
    if M_pad != M:
        pad = ((0, 0), (0, M_pad - M))
        x_cf = jnp.pad(x_cf, pad)
        g_cf = jnp.pad(g_cf, pad)

    grid = (M_pad // tm,)
    px_spec = pl.BlockSpec((C, tm), lambda i: (0, i))
    w_spec = pl.BlockSpec((C, C), lambda i: (0, 0))
    b_spec = pl.BlockSpec((C, 1), lambda i: (0, 0))

    cost = pl.CostEstimate(
        flops=6 * M_pad * C * C,
        transcendentals=M_pad * C,
        bytes_accessed=3 * M_pad * C * item + 3 * C * C * 4,
    )

    out_cf = pl.pallas_call(
        _gate_kernel_small_c,
        out_shape=jax.ShapeDtypeStruct((C, M_pad), out_dtype),
        grid_spec=pltpu.PrefetchScalarGridSpec(
            num_scalar_prefetch=0,
            grid=grid,
            in_specs=[px_spec, px_spec, w_spec, w_spec, b_spec, w_spec, b_spec],
            out_specs=px_spec,
        ),
        compiler_params=pltpu.CompilerParams(
            dimension_semantics=("parallel",),
            vmem_limit_bytes=vmem_budget_bytes,
        ),
        cost_estimate=cost,
    )(x_cf, g_cf, wt32, wp32, b_tp, wpsi32, b_psi)

    return out_cf[:, :M].T.reshape(N, H, W, C)


# --------------------------------------------------------------------------- #
# Public wrapper
# --------------------------------------------------------------------------- #
def attention_gate(x, g, params, *, tm=None,
                   vmem_budget_bytes=_DEFAULT_VMEM_BUDGET, matmul_dtype=None):
    """AttentionGate forward.  x, g: (N, H, W, C) NHWC; returns NHWC.

    params: PyTorch-style weights (C_out, C_in) and biases (C,) for theta/phi/psi.
    tm: rows (pixels) per tile; auto-derived from `vmem_budget_bytes` if None.
    matmul_dtype: e.g. jnp.bfloat16 to run the MXU dots in bf16 (v6e/v7x fast path).
    """
    assert x.shape == g.shape and x.ndim == 4
    C = x.shape[-1]
    args = (x, g, params["theta_w"], params["phi_w"], params["theta_b"],
            params["phi_b"], params["psi_w"], params["psi_b"])

    def unpack(x, g, wt, wp, bt, bp, wpsi, bpsi):
        return x, g, wt, wp, bt, bp, wpsi, bpsi

    x, g, wt, wp, bt, bp, wpsi, bpsi = unpack(*args)
    if C >= _LANE:
        return _gate_mxu(x, g, wt, wp, bt, bp, wpsi, bpsi, tm=tm,
                         vmem_budget_bytes=vmem_budget_bytes,
                         matmul_dtype=matmul_dtype)
    return _gate_small_c(x, g, wt, wp, bt, bp, wpsi, bpsi, tm=tm,
                         vmem_budget_bytes=vmem_budget_bytes)


def init_params(key, in_channels):
    """Deterministic synthetic parameters (PyTorch Conv2d 1x1 shapes)."""
    ks = jax.random.split(key, 6)
    scale = 1.0 / jnp.sqrt(in_channels)
    u = lambda k, shape: jax.random.uniform(k, shape, jnp.float32, -scale, scale)
    return {
        "theta_w": u(ks[0], (in_channels, in_channels)),
        "theta_b": u(ks[1], (in_channels,)),
        "phi_w": u(ks[2], (in_channels, in_channels)),
        "phi_b": u(ks[3], (in_channels,)),
        "psi_w": u(ks[4], (in_channels, in_channels)),
        "psi_b": u(ks[5], (in_channels,)),
    }


def attention_gate_ref(x, g, params):
    """Pure-JAX reference mirroring the PyTorch module (channels-last math)."""
    hp = jax.lax.Precision.HIGHEST
    theta_x = jnp.einsum("nhwc,oc->nhwo", x, params["theta_w"],
                         precision=hp) + params["theta_b"]
    phi_g = jnp.einsum("nhwc,oc->nhwo", g, params["phi_w"],
                       precision=hp) + params["phi_b"]
    psi = jnp.einsum("nhwc,oc->nhwo", jax.nn.sigmoid(theta_x + phi_g),
                     params["psi_w"], precision=hp) + params["psi_b"]
    return x * psi


if __name__ == "__main__":
    key = jax.random.PRNGKey(0)
    kx, kg, kp, kx2, kg2, kp2 = jax.random.split(key, 6)

    # --- Case 1: small channel count (C=4) -> channels-first lane-dense VPU path.
    N, H, W, C = 2, 16, 16, 4
    x = jax.random.normal(kx, (N, H, W, C), dtype=jnp.float32)
    g = jax.random.normal(kg, (N, H, W, C), dtype=jnp.float32)
    params = init_params(kp, C)

    out = jax.block_until_ready(attention_gate(x, g, params))
    ref = attention_gate_ref(x, g, params)
    assert out.shape == (N, H, W, C)
    assert jnp.allclose(out, ref, atol=1e-5, rtol=1e-5), "small-C path mismatch"

    # --- Case 2: C=128 -> MXU path, f32 dots (tight check).
    N2, H2, W2, C2 = 2, 16, 16, 128
    x2 = jax.random.normal(kx2, (N2, H2, W2, C2), dtype=jnp.float32)
    g2 = jax.random.normal(kg2, (N2, H2, W2, C2), dtype=jnp.float32)
    params2 = init_params(kp2, C2)

    out2 = jax.block_until_ready(attention_gate(x2, g2, params2))
    ref2 = attention_gate_ref(x2, g2, params2)
    assert jnp.allclose(out2, ref2, atol=1e-4, rtol=1e-4), "MXU f32 path mismatch"

    # --- Case 3: MXU path with bf16 matmuls (v6e/v7x fast path), loose check.
    out3 = jax.block_until_ready(
        attention_gate(x2, g2, params2, matmul_dtype=jnp.bfloat16))
    max_err = float(jnp.max(jnp.abs(out3 - ref2)))
    assert max_err < 0.3, f"bf16 MXU path error too large: {max_err}"

    print("KERNEL_OK")
</pallas_src>

<mosaic_0001>
module attributes {stable_mosaic.version = 11 : i64} {
  func.func @_gate_kernel_small_c(%arg0: i32, %arg1: memref<4x512xf32, #tpu.memory_space<vmem>>, %arg2: memref<4x512xf32, #tpu.memory_space<vmem>>, %arg3: memref<4x4xf32, #tpu.memory_space<vmem>>, %arg4: memref<4x4xf32, #tpu.memory_space<vmem>>, %arg5: memref<4x1xf32, #tpu.memory_space<vmem>>, %arg6: memref<4x4xf32, #tpu.memory_space<vmem>>, %arg7: memref<4x1xf32, #tpu.memory_space<vmem>>, %arg8: memref<4x512xf32, #tpu.memory_space<vmem>>) attributes {dimension_semantics = [#tpu.dimension_semantics<parallel>], iteration_bounds = array<i64: 1>, scalar_prefetch = 0 : i64, scratch_operands = 0 : i64, tpu.core_type = #tpu.core_type<tc>, window_params = [{transform_indices = @transform_0, window_bounds = array<i64: 4, 512>}, {transform_indices = @transform_1, window_bounds = array<i64: 4, 512>}, {pipeline_mode = #tpu.pipeline_mode<synchronous>, transform_indices = @transform_2, window_bounds = array<i64: 4, 4>}, {pipeline_mode = #tpu.pipeline_mode<synchronous>, transform_indices = @transform_3, window_bounds = array<i64: 4, 4>}, {pipeline_mode = #tpu.pipeline_mode<synchronous>, transform_indices = @transform_4, window_bounds = array<i64: 4, 1>}, {pipeline_mode = #tpu.pipeline_mode<synchronous>, transform_indices = @transform_5, window_bounds = array<i64: 4, 4>}, {pipeline_mode = #tpu.pipeline_mode<synchronous>, transform_indices = @transform_6, window_bounds = array<i64: 4, 1>}, {transform_indices = @transform_7, window_bounds = array<i64: 4, 512>}]} {
    %c0 = arith.constant 0 : index
    %c0_0 = arith.constant 0 : index
    %0 = vector.load %arg1[%c0, %c0_0] : memref<4x512xf32, #tpu.memory_space<vmem>>, vector<4x512xf32>
    %c0_1 = arith.constant 0 : index
    %c0_2 = arith.constant 0 : index
    %1 = vector.load %arg2[%c0_1, %c0_2] : memref<4x512xf32, #tpu.memory_space<vmem>>, vector<4x512xf32>
    %c0_3 = arith.constant 0 : index
    %c0_4 = arith.constant 0 : index
    %2 = vector.load %arg3[%c0_3, %c0_4] : memref<4x4xf32, #tpu.memory_space<vmem>>, vector<4x4xf32>
    %c0_5 = arith.constant 0 : index
    %c0_6 = arith.constant 0 : index
    %3 = vector.load %arg4[%c0_5, %c0_6] : memref<4x4xf32, #tpu.memory_space<vmem>>, vector<4x4xf32>
    %c0_7 = arith.constant 0 : index
    %c0_8 = arith.constant 0 : index
    %4 = vector.load %arg6[%c0_7, %c0_8] : memref<4x4xf32, #tpu.memory_space<vmem>>, vector<4x4xf32>
    %cst = arith.constant 1.000000e+00 : f32
    %5 = vector.broadcast %cst : f32 to vector<1x512xf32>
    %c0_9 = arith.constant 0 : index
    %c0_10 = arith.constant 0 : index
    %6 = vector.load %arg5[%c0_9, %c0_10] : memref<4x1xf32, #tpu.memory_space<vmem>>, vector<4x1xf32>
    %7 = vector.broadcast %6 : vector<4x1xf32> to vector<4x512xf32>
    %8 = vector.broadcast %5 : vector<1x512xf32> to vector<4x512xf32>
    %9 = arith.mulf %7, %8 : vector<4x512xf32>
    %10 = vector.extract_strided_slice %2 {offsets = [0, 0], sizes = [4, 1], strides = [1, 1]} : vector<4x4xf32> to vector<4x1xf32>
    %11 = vector.extract_strided_slice %0 {offsets = [0, 0], sizes = [1, 512], strides = [1, 1]} : vector<4x512xf32> to vector<1x512xf32>
    %12 = vector.broadcast %10 : vector<4x1xf32> to vector<4x512xf32>
    %13 = vector.broadcast %11 : vector<1x512xf32> to vector<4x512xf32>
    %14 = arith.mulf %12, %13 : vector<4x512xf32>
    %15 = arith.addf %9, %14 : vector<4x512xf32>
    %16 = vector.extract_strided_slice %3 {offsets = [0, 0], sizes = [4, 1], strides = [1, 1]} : vector<4x4xf32> to vector<4x1xf32>
    %17 = vector.extract_strided_slice %1 {offsets = [0, 0], sizes = [1, 512], strides = [1, 1]} : vector<4x512xf32> to vector<1x512xf32>
    %18 = vector.broadcast %16 : vector<4x1xf32> to vector<4x512xf32>
    %19 = vector.broadcast %17 : vector<1x512xf32> to vector<4x512xf32>
    %20 = arith.mulf %18, %19 : vector<4x512xf32>
    %21 = arith.addf %15, %20 : vector<4x512xf32>
    %22 = vector.extract_strided_slice %2 {offsets = [0, 1], sizes = [4, 1], strides = [1, 1]} : vector<4x4xf32> to vector<4x1xf32>
    %23 = vector.extract_strided_slice %0 {offsets = [1, 0], sizes = [1, 512], strides = [1, 1]} : vector<4x512xf32> to vector<1x512xf32>
    %24 = vector.broadcast %22 : vector<4x1xf32> to vector<4x512xf32>
    %25 = vector.broadcast %23 : vector<1x512xf32> to vector<4x512xf32>
    %26 = arith.mulf %24, %25 : vector<4x512xf32>
    %27 = arith.addf %21, %26 : vector<4x512xf32>
    %28 = vector.extract_strided_slice %3 {offsets = [0, 1], sizes = [4, 1], strides = [1, 1]} : vector<4x4xf32> to vector<4x1xf32>
    %29 = vector.extract_strided_slice %1 {offsets = [1, 0], sizes = [1, 512], strides = [1, 1]} : vector<4x512xf32> to vector<1x512xf32>
    %30 = vector.broadcast %28 : vector<4x1xf32> to vector<4x512xf32>
    %31 = vector.broadcast %29 : vector<1x512xf32> to vector<4x512xf32>
    %32 = arith.mulf %30, %31 : vector<4x512xf32>
    %33 = arith.addf %27, %32 : vector<4x512xf32>
    %34 = vector.extract_strided_slice %2 {offsets = [0, 2], sizes = [4, 1], strides = [1, 1]} : vector<4x4xf32> to vector<4x1xf32>
    %35 = vector.extract_strided_slice %0 {offsets = [2, 0], sizes = [1, 512], strides = [1, 1]} : vector<4x512xf32> to vector<1x512xf32>
    %36 = vector.broadcast %34 : vector<4x1xf32> to vector<4x512xf32>
    %37 = vector.broadcast %35 : vector<1x512xf32> to vector<4x512xf32>
    %38 = arith.mulf %36, %37 : vector<4x512xf32>
    %39 = arith.addf %33, %38 : vector<4x512xf32>
    %40 = vector.extract_strided_slice %3 {offsets = [0, 2], sizes = [4, 1], strides = [1, 1]} : vector<4x4xf32> to vector<4x1xf32>
    %41 = vector.extract_strided_slice %1 {offsets = [2, 0], sizes = [1, 512], strides = [1, 1]} : vector<4x512xf32> to vector<1x512xf32>
    %42 = vector.broadcast %40 : vector<4x1xf32> to vector<4x512xf32>
    %43 = vector.broadcast %41 : vector<1x512xf32> to vector<4x512xf32>
    %44 = arith.mulf %42, %43 : vector<4x512xf32>
    %45 = arith.addf %39, %44 : vector<4x512xf32>
    %46 = vector.extract_strided_slice %2 {offsets = [0, 3], sizes = [4, 1], strides = [1, 1]} : vector<4x4xf32> to vector<4x1xf32>
    %47 = vector.extract_strided_slice %0 {offsets = [3, 0], sizes = [1, 512], strides = [1, 1]} : vector<4x512xf32> to vector<1x512xf32>
    %48 = vector.broadcast %46 : vector<4x1xf32> to vector<4x512xf32>
    %49 = vector.broadcast %47 : vector<1x512xf32> to vector<4x512xf32>
    %50 = arith.mulf %48, %49 : vector<4x512xf32>
    %51 = arith.addf %45, %50 : vector<4x512xf32>
    %52 = vector.extract_strided_slice %3 {offsets = [0, 3], sizes = [4, 1], strides = [1, 1]} : vector<4x4xf32> to vector<4x1xf32>
    %53 = vector.extract_strided_slice %1 {offsets = [3, 0], sizes = [1, 512], strides = [1, 1]} : vector<4x512xf32> to vector<1x512xf32>
    %54 = vector.broadcast %52 : vector<4x1xf32> to vector<4x512xf32>
    %55 = vector.broadcast %53 : vector<1x512xf32> to vector<4x512xf32>
    %56 = arith.mulf %54, %55 : vector<4x512xf32>
    %57 = arith.addf %51, %56 : vector<4x512xf32>
    %58 = arith.negf %57 : vector<4x512xf32>
    %59 = math.exp %58 : vector<4x512xf32>
    %cst_11 = arith.constant 1.000000e+00 : f32
    %60 = vector.broadcast %cst_11 : f32 to vector<4x512xf32>
    %61 = arith.addf %60, %59 : vector<4x512xf32>
    %62 = arith.divf %60, %61 : vector<4x512xf32>
    %c0_12 = arith.constant 0 : index
    %c0_13 = arith.constant 0 : index
    %63 = vector.load %arg7[%c0_12, %c0_13] : memref<4x1xf32, #tpu.memory_space<vmem>>, vector<4x1xf32>
    %64 = vector.broadcast %63 : vector<4x1xf32> to vector<4x512xf32>
    %65 = vector.broadcast %5 : vector<1x512xf32> to vector<4x512xf32>
    %66 = arith.mulf %64, %65 : vector<4x512xf32>
    %67 = vector.extract_strided_slice %4 {offsets = [0, 0], sizes = [4, 1], strides = [1, 1]} : vector<4x4xf32> to vector<4x1xf32>
    %68 = vector.extract_strided_slice %62 {offsets = [0, 0], sizes = [1, 512], strides = [1, 1]} : vector<4x512xf32> to vector<1x512xf32>
    %69 = vector.broadcast %67 : vector<4x1xf32> to vector<4x512xf32>
    %70 = vector.broadcast %68 : vector<1x512xf32> to vector<4x512xf32>
    %71 = arith.mulf %69, %70 : vector<4x512xf32>
    %72 = arith.addf %66, %71 : vector<4x512xf32>
    %73 = vector.extract_strided_slice %4 {offsets = [0, 1], sizes = [4, 1], strides = [1, 1]} : vector<4x4xf32> to vector<4x1xf32>
    %74 = vector.extract_strided_slice %62 {offsets = [1, 0], sizes = [1, 512], strides = [1, 1]} : vector<4x512xf32> to vector<1x512xf32>
    %75 = vector.broadcast %73 : vector<4x1xf32> to vector<4x512xf32>
    %76 = vector.broadcast %74 : vector<1x512xf32> to vector<4x512xf32>
    %77 = arith.mulf %75, %76 : vector<4x512xf32>
    %78 = arith.addf %72, %77 : vector<4x512xf32>
    %79 = vector.extract_strided_slice %4 {offsets = [0, 2], sizes = [4, 1], strides = [1, 1]} : vector<4x4xf32> to vector<4x1xf32>
    %80 = vector.extract_strided_slice %62 {offsets = [2, 0], sizes = [1, 512], strides = [1, 1]} : vector<4x512xf32> to vector<1x512xf32>
    %81 = vector.broadcast %79 : vector<4x1xf32> to vector<4x512xf32>
    %82 = vector.broadcast %80 : vector<1x512xf32> to vector<4x512xf32>
    %83 = arith.mulf %81, %82 : vector<4x512xf32>
    %84 = arith.addf %78, %83 : vector<4x512xf32>
    %85 = vector.extract_strided_slice %4 {offsets = [0, 3], sizes = [4, 1], strides = [1, 1]} : vector<4x4xf32> to vector<4x1xf32>
    %86 = vector.extract_strided_slice %62 {offsets = [3, 0], sizes = [1, 512], strides = [1, 1]} : vector<4x512xf32> to vector<1x512xf32>
    %87 = vector.broadcast %85 : vector<4x1xf32> to vector<4x512xf32>
    %88 = vector.broadcast %86 : vector<1x512xf32> to vector<4x512xf32>
    %89 = arith.mulf %87, %88 : vector<4x512xf32>
    %90 = arith.addf %84, %89 : vector<4x512xf32>
    %91 = arith.mulf %0, %90 : vector<4x512xf32>
    %c0_14 = arith.constant 0 : index
    %c0_15 = arith.constant 0 : index
    %92 = vector.load %arg8[%c0_14, %c0_15] : memref<4x512xf32, #tpu.memory_space<vmem>>, vector<4x512xf32>
    tpu.vector_store %arg8[%c0_14, %c0_15], %91 {strides = array<i32>} : memref<4x512xf32, #tpu.memory_space<vmem>>, vector<4x512xf32>,
    return
  }
  func.func @transform_0(%arg0: i32) -> (i32, i32) {
    %c0_i32 = arith.constant 0 : i32
    %c0_i32_0 = arith.constant 0 : i32
    return %c0_i32, %arg0 : i32, i32
  }
  func.func @transform_1(%arg0: i32) -> (i32, i32) {
    %c0_i32 = arith.constant 0 : i32
    %c0_i32_0 = arith.constant 0 : i32
    return %c0_i32, %arg0 : i32, i32
  }
  func.func @transform_2(%arg0: i32) -> (i32, i32) {
    %c0_i32 = arith.constant 0 : i32
    %c0_i32_0 = arith.constant 0 : i32
    %c0_i32_1 = arith.constant 0 : i32
    return %c0_i32, %c0_i32_0 : i32, i32
  }
  func.func @transform_3(%arg0: i32) -> (i32, i32) {
    %c0_i32 = arith.constant 0 : i32
    %c0_i32_0 = arith.constant 0 : i32
    %c0_i32_1 = arith.constant 0 : i32
    return %c0_i32, %c0_i32_0 : i32, i32
  }
  func.func @transform_4(%arg0: i32) -> (i32, i32) {
    %c0_i32 = arith.constant 0 : i32
    %c0_i32_0 = arith.constant 0 : i32
    %c0_i32_1 = arith.constant 0 : i32
    return %c0_i32, %c0_i32_0 : i32, i32
  }
  func.func @transform_5(%arg0: i32) -> (i32, i32) {
    %c0_i32 = arith.constant 0 : i32
    %c0_i32_0 = arith.constant 0 : i32
    %c0_i32_1 = arith.constant 0 : i32
    return %c0_i32, %c0_i32_0 : i32, i32
  }
  func.func @transform_6(%arg0: i32) -> (i32, i32) {
    %c0_i32 = arith.constant 0 : i32
    %c0_i32_0 = arith.constant 0 : i32
    %c0_i32_1 = arith.constant 0 : i32
    return %c0_i32, %c0_i32_0 : i32, i32
  }
  func.func @transform_7(%arg0: i32) -> (i32, i32) {
    %c0_i32 = arith.constant 0 : i32
    %c0_i32_0 = arith.constant 0 : i32
    return %c0_i32, %arg0 : i32, i32
  }
}

</mosaic_0001>

<llo_original>
// kernel: tpu_custom_call.1
$region0: #{tpu_custom_call.1}
  #allocation0 [shape = 'u32[]', space=smem, size = 0x4, offset = 0x4, fixed_abs, tag = 'smem constant byte address 0x4 - core index']
  #allocation1 [shape = 'u32[144,128]{1,0:T(1,128)}', space=vmem, size = 0x12000, scoped, tag = 'internal scratch']
  %s0 = inlined_call_operand.hbm [shape: f32[4,512], index: 0, kind: input, shape index: {}]
  %s1 = inlined_call_operand.hbm [shape: f32[4,512], index: 1, kind: input, shape index: {}]
  %s2 = inlined_call_operand.vmem [shape: f32[4,4], index: 2, kind: input, shape index: {}]
  %s3 = inlined_call_operand.vmem [shape: f32[4,4], index: 3, kind: input, shape index: {}]
  %s4 = inlined_call_operand.vmem [shape: f32[4,1], index: 4, kind: input, shape index: {}]
  %s5 = inlined_call_operand.vmem [shape: f32[4,4], index: 5, kind: input, shape index: {}]
  %s6 = inlined_call_operand.vmem [shape: f32[4,1], index: 6, kind: input, shape index: {}]
  %s7 = inlined_call_operand.hbm [shape: f32[4,512], index: 7, kind: output, shape index: {}]
  %s8 = sld [smem:[#allocation0]]
  $region46: #{tpu_custom_call.1} parent=0
    _
  %s10 = ssub.s32 1, %s8
  %s11 = scalar_select 0, %s10, %s8
  $region1: #{tpu_custom_call.1} parent=0
    #allocation2 [shape = 'u8[8192]{0}', space=vmem, size = 0x2000, scoped, tag = 'input window, operand 0, single buffered']
    #allocation3 [shape = 's32[1]{0}', space=sflag, size = 0x4, scoped, tag = 'scoped memory for tpu_custom_call.1']
    #allocation4 [shape = 's32[1]{0}', space=sflag, size = 0x4, scoped, tag = 'scoped memory for tpu_custom_call.1']
    #allocation5 [shape = 'u8[8192]{0}', space=vmem, size = 0x2000, scoped, tag = 'input window, operand 1, single buffered']
    #allocation6 [shape = 's32[1]{0}', space=sflag, size = 0x4, scoped, tag = 'scoped memory for tpu_custom_call.1']
    #allocation7 [shape = 'u8[8192]{0}', space=vmem, size = 0x2000, scoped, tag = 'output window, operand 0, single buffered']
    %12 = vsyncpa [#allocation3], 0
    %13 = vsyncpa [#allocation6], 0
    %14 = vsyncpa [#allocation4], 0
    // Predicated region
    $region2: #{tpu_custom_call.1} parent=1 // pred_check
      _
    $region3: #{tpu_custom_call.1} parent=1 // pred_check_branch
      %16 = sbr.rel (0) target = $region5
    $region4: #{tpu_custom_call.1} parent=1 // pred_region
      %s18 = ssub.s32 256, 256
      %19 = vsyncadd [#allocation3], %s18
      %s21 = sshll.u32 [#allocation2], 4
      %s22 = int_to_ptr.vmem [resolvable:$true] %s21
      %24 = dma.hbm_to_vmem [thread:$0]  %s0, 256, %s22, [#allocation3]
    $region5: #{tpu_custom_call.1} parent=1 // pred_fallthru
      _
    // Predicated region
    $region6: #{tpu_custom_call.1} parent=1 // pred_check
      _
    $region7: #{tpu_custom_call.1} parent=1 // pred_check_branch
      %26 = sbr.rel (0) target = $region9
    $region8: #{tpu_custom_call.1} parent=1 // pred_region
      %s28 = ssub.s32 256, 256
      %29 = vsyncadd [#allocation6], %s28
      %s31 = sshll.u32 [#allocation5], 4
      %s32 = int_to_ptr.vmem [resolvable:$true] %s31
      %34 = dma.hbm_to_vmem [thread:$0]  %s1, 256, %s32, [#allocation6]
    $region9: #{tpu_custom_call.1} parent=1 // pred_fallthru
      _
    // Predicated region
    $region10: #{tpu_custom_call.1} parent=1 // pred_check
      _
    $region11: #{tpu_custom_call.1} parent=1 // pred_check_branch
      %36 = sbr.rel (0) target = $region13
    $region12: #{tpu_custom_call.1} parent=1 // pred_region
      _
    $region13: #{tpu_custom_call.1} parent=1 // pred_fallthru
      _
    // Predicated region
    $region14: #{tpu_custom_call.1} parent=1 // pred_check
      _
    $region15: #{tpu_custom_call.1} parent=1 // pred_check_branch
      %38 = sbr.rel (0) target = $region17
    $region16: #{tpu_custom_call.1} parent=1 // pred_region
      _
    $region17: #{tpu_custom_call.1} parent=1 // pred_fallthru
      _
    // Predicated region
    $region18: #{tpu_custom_call.1} parent=1 // pred_check
      _
    $region19: #{tpu_custom_call.1} parent=1 // pred_check_branch
      %40 = sbr.rel (0) target = $region21
    $region20: #{tpu_custom_call.1} parent=1 // pred_region
      _
    $region21: #{tpu_custom_call.1} parent=1 // pred_fallthru
      _
    // Predicated region
    $region22: #{tpu_custom_call.1} parent=1 // pred_check
      _
    $region23: #{tpu_custom_call.1} parent=1 // pred_check_branch
      %42 = sbr.rel (0) target = $region25
    $region24: #{tpu_custom_call.1} parent=1 // pred_region
      _
    $region25: #{tpu_custom_call.1} parent=1 // pred_fallthru
      _
    // Predicated region
    $region26: #{tpu_custom_call.1} parent=1 // pred_check
      _
    $region27: #{tpu_custom_call.1} parent=1 // pred_check_branch
      %44 = sbr.rel (0) target = $region29
    $region28: #{tpu_custom_call.1} parent=1 // pred_region
      _
    $region29: #{tpu_custom_call.1} parent=1 // pred_fallthru
      _
    // Predicated region
    $region30: #{tpu_custom_call.1} parent=1 // pred_check
      _
    $region31: #{tpu_custom_call.1} parent=1 // pred_check_branch
      %46 = sbr.rel (0) target = $region33
    $region32: #{tpu_custom_call.1} parent=1 // pred_region
      %47 = dma.done [#allocation3], 256
    $region33: #{tpu_custom_call.1} parent=1 // pred_fallthru
      _
    // Predicated region
    $region34: #{tpu_custom_call.1} parent=1 // pred_check
      _
    $region35: #{tpu_custom_call.1} parent=1 // pred_check_branch
      %49 = sbr.rel (0) target = $region37
    $region36: #{tpu_custom_call.1} parent=1 // pred_region
      %50 = dma.done [#allocation6], 256
    $region37: #{tpu_custom_call.1} parent=1 // pred_fallthru
      _
    %v51 = vld [vmem:[#allocation2] sm:$0xff]
    %v52 = vld [vmem:[#allocation2 + $0x8] sm:$0xff]
    %v53 = vld [vmem:[#allocation5] sm:$0xff]
    %v54 = vld [vmem:[#allocation5 + $0x8] sm:$0xff]
    %v55 = vld [vmem:[%s2] sm:$0xf]
    %v56 = vld [vmem:[%s3] sm:$0xf]
    %v57 = vld [vmem:[%s5] sm:$0xf]
    %v58 = vld [vmem:[%s4] sm:$0xf]
    %60 = vset.pattern.permute.xlu0 0
    %61 = vperm.xlu0 %60, %v58
    %v62 = vpop.permute.xlu0 %61
    %65 = vset.pattern.permute.xlu0 0
    %66 = vperm.xlu0 %65, %v55
    %v67 = vpop.permute.xlu0 %66
    %v71 = vlaneseq
    %v72 = vshrl.u32 %v71, 7
    %v73 = vsub.s32 0, %v72
    %v74 = vrot.slane %v51, %v73
    %v75 = vlaneseq
    %v76 = vshrl.u32 %v75, 7
    %v77 = vsub.s32 4, %v76
    %v78 = vrot.slane %v51, %v77
    %v79 = vlaneseq
    %v80 = vshrl.u32 %v79, 7
    %v81 = vsub.s32 0, %v80
    %v82 = vrot.slane %v52, %v81
    %v83 = vlaneseq
    %v84 = vshrl.u32 %v83, 7
    %v85 = vsub.s32 4, %v84
    %v86 = vrot.slane %v52, %v85
    %v91 = vlaneseq
    %v92 = vshrl.u32 %v91, 7
    %v93 = vsub.s32 0, %v92
    %v94 = vrot.slane %v74, %v93
    %v95 = vlaneseq
    %v96 = vshrl.u32 %v95, 7
    %v97 = vsub.s32 0, %v96
    %v98 = vrot.slane %v78, %v97
    %v99 = vlaneseq
    %v100 = vshrl.u32 %v99, 7
    %v101 = vsub.s32 0, %v100
    %v102 = vrot.slane %v82, %v101
    %v103 = vlaneseq
    %v104 = vshrl.u32 %v103, 7
    %v105 = vsub.s32 0, %v104
    %v106 = vrot.slane %v86, %v105
    %v107 = vmul.f32 %v67, %v94
    %v108 = vmul.f32 %v67, %v98
    %v109 = vmul.f32 %v67, %v102
    %v110 = vmul.f32 %v67, %v106
    %v111 = vadd.f32 %v62, %v107
    %v112 = vadd.f32 %v62, %v108
    %v113 = vadd.f32 %v62, %v109
    %v114 = vadd.f32 %v62, %v110
    %116 = vset.pattern.permute.xlu0 0
    %117 = vperm.xlu0 %116, %v56
    %v118 = vpop.permute.xlu0 %117
    %v122 = vlaneseq
    %v123 = vshrl.u32 %v122, 7
    %v124 = vsub.s32 0, %v123
    %v125 = vrot.slane %v53, %v124
    %v126 = vlaneseq
    %v127 = vshrl.u32 %v126, 7
    %v128 = vsub.s32 4, %v127
    %v129 = vrot.slane %v53, %v128
    %v130 = vlaneseq
    %v131 = vshrl.u32 %v130, 7
    %v132 = vsub.s32 0, %v131
    %v133 = vrot.slane %v54, %v132
    %v134 = vlaneseq
    %v135 = vshrl.u32 %v134, 7
    %v136 = vsub.s32 4, %v135
    %v137 = vrot.slane %v54, %v136
    %v142 = vlaneseq
    %v143 = vshrl.u32 %v142, 7
    %v144 = vsub.s32 0, %v143
    %v145 = vrot.slane %v125, %v144
    %v146 = vlaneseq
    %v147 = vshrl.u32 %v146, 7
    %v148 = vsub.s32 0, %v147
    %v149 = vrot.slane %v129, %v148
    %v150 = vlaneseq
    %v151 = vshrl.u32 %v150, 7
    %v152 = vsub.s32 0, %v151
    %v153 = vrot.slane %v133, %v152
    %v154 = vlaneseq
    %v155 = vshrl.u32 %v154, 7
    %v156 = vsub.s32 0, %v155
    %v157 = vrot.slane %v137, %v156
    %v158 = vmul.f32 %v118, %v145
    %v159 = vmul.f32 %v118, %v149
    %v160 = vmul.f32 %v118, %v153
    %v161 = vmul.f32 %v118, %v157
    %v162 = vadd.f32 %v111, %v158
    %v163 = vadd.f32 %v112, %v159
    %v164 = vadd.f32 %v113, %v160
    %v165 = vadd.f32 %v114, %v161
    %166 = vset.pattern.permute.xlu0 1
    %167 = vperm.xlu0 %166, %v55
    %v168 = vpop.permute.xlu0 %167
    %v170 = vlaneseq
    %v171 = vshrl.u32 %v170, 7
    %v172 = vsub.s32 1, %v171
    %v173 = vrot.slane %v51, %v172
    %v174 = vlaneseq
    %v175 = vshrl.u32 %v174, 7
    %v176 = vsub.s32 5, %v175
    %v177 = vrot.slane %v51, %v176
    %v178 = vlaneseq
    %v179 = vshrl.u32 %v178, 7
    %v180 = vsub.s32 1, %v179
    %v181 = vrot.slane %v52, %v180
    %v182 = vlaneseq
    %v183 = vshrl.u32 %v182, 7
    %v184 = vsub.s32 5, %v183
    %v185 = vrot.slane %v52, %v184
    %v190 = vlaneseq
    %v191 = vshrl.u32 %v190, 7
    %v192 = vsub.s32 1, %v191
    %v193 = vrot.slane %v173, %v192
    %v194 = vlaneseq
    %v195 = vshrl.u32 %v194, 7
    %v196 = vsub.s32 1, %v195
    %v197 = vrot.slane %v177, %v196
    %v198 = vlaneseq
    %v199 = vshrl.u32 %v198, 7
    %v200 = vsub.s32 1, %v199
    %v201 = vrot.slane %v181, %v200
    %v202 = vlaneseq
    %v203 = vshrl.u32 %v202, 7
    %v204 = vsub.s32 1, %v203
    %v205 = vrot.slane %v185, %v204
    %v206 = vmul.f32 %v168, %v193
    %v207 = vmul.f32 %v168, %v197
    %v208 = vmul.f32 %v168, %v201
    %v209 = vmul.f32 %v168, %v205
    %v210 = vadd.f32 %v162, %v206
    %v211 = vadd.f32 %v163, %v207
    %v212 = vadd.f32 %v164, %v208
    %v213 = vadd.f32 %v165, %v209
    %214 = vset.pattern.permute.xlu0 1
    %215 = vperm.xlu0 %214, %v56
    %v216 = vpop.permute.xlu0 %215
    %v218 = vlaneseq
    %v219 = vshrl.u32 %v218, 7
    %v220 = vsub.s32 1, %v219
    %v221 = vrot.slane %v53, %v220
    %v222 = vlaneseq
    %v223 = vshrl.u32 %v222, 7
    %v224 = vsub.s32 5, %v223
    %v225 = vrot.slane %v53, %v224
    %v226 = vlaneseq
    %v227 = vshrl.u32 %v226, 7
    %v228 = vsub.s32 1, %v227
    %v229 = vrot.slane %v54, %v228
    %v230 = vlaneseq
    %v231 = vshrl.u32 %v230, 7
    %v232 = vsub.s32 5, %v231
    %v233 = vrot.slane %v54, %v232
    %v238 = vlaneseq
    %v239 = vshrl.u32 %v238, 7
    %v240 = vsub.s32 1, %v239
    %v241 = vrot.slane %v221, %v240
    %v242 = vlaneseq
    %v243 = vshrl.u32 %v242, 7
    %v244 = vsub.s32 1, %v243
    %v245 = vrot.slane %v225, %v244
    %v246 = vlaneseq
    %v247 = vshrl.u32 %v246, 7
    %v248 = vsub.s32 1, %v247
    %v249 = vrot.slane %v229, %v248
    %v250 = vlaneseq
    %v251 = vshrl.u32 %v250, 7
    %v252 = vsub.s32 1, %v251
    %v253 = vrot.slane %v233, %v252
    %v254 = vmul.f32 %v216, %v241
    %v255 = vmul.f32 %v216, %v245
    %v256 = vmul.f32 %v216, %v249
    %v257 = vmul.f32 %v216, %v253
    %v258 = vadd.f32 %v210, %v254
    %v259 = vadd.f32 %v211, %v255
    %v260 = vadd.f32 %v212, %v256
    %v261 = vadd.f32 %v213, %v257
    %262 = vset.pattern.permute.xlu0 2
    %263 = vperm.xlu0 %262, %v55
    %v264 = vpop.permute.xlu0 %263
    %v266 = vlaneseq
    %v267 = vshrl.u32 %v266, 7
    %v268 = vsub.s32 2, %v267
    %v269 = vrot.slane %v51, %v268
    %v270 = vlaneseq
    %v271 = vshrl.u32 %v270, 7
    %v272 = vsub.s32 6, %v271
    %v273 = vrot.slane %v51, %v272
    %v274 = vlaneseq
    %v275 = vshrl.u32 %v274, 7
    %v276 = vsub.s32 2, %v275
    %v277 = vrot.slane %v52, %v276
    %v278 = vlaneseq
    %v279 = vshrl.u32 %v278, 7
    %v280 = vsub.s32 6, %v279
    %v281 = vrot.slane %v52, %v280
    %v286 = vlaneseq
    %v287 = vshrl.u32 %v286, 7
    %v288 = vsub.s32 2, %v287
    %v289 = vrot.slane %v269, %v288
    %v290 = vlaneseq
    %v291 = vshrl.u32 %v290, 7
    %v292 = vsub.s32 2, %v291
    %v293 = vrot.slane %v273, %v292
    %v294 = vlaneseq
    %v295 = vshrl.u32 %v294, 7
    %v296 = vsub.s32 2, %v295
    %v297 = vrot.slane %v277, %v296
    %v298 = vlaneseq
    %v299 = vshrl.u32 %v298, 7
    %v300 = vsub.s32 2, %v299
    %v301 = vrot.slane %v281, %v300
    %v302 = vmul.f32 %v264, %v289
    %v303 = vmul.f32 %v264, %v293
    %v304 = vmul.f32 %v264, %v297
    %v305 = vmul.f32 %v264, %v301
    %v306 = vadd.f32 %v258, %v302
    %v307 = vadd.f32 %v259, %v303
    %v308 = vadd.f32 %v260, %v304
    %v309 = vadd.f32 %v261, %v305
    %310 = vset.pattern.permute.xlu0 2
    %311 = vperm.xlu0 %310, %v56
    %v312 = vpop.permute.xlu0 %311
    %v314 = vlaneseq
    %v315 = vshrl.u32 %v314, 7
    %v316 = vsub.s32 2, %v315
    %v317 = vrot.slane %v53, %v316
    %v318 = vlaneseq
    %v319 = vshrl.u32 %v318, 7
    %v320 = vsub.s32 6, %v319
    %v321 = vrot.slane %v53, %v320
    %v322 = vlaneseq
    %v323 = vshrl.u32 %v322, 7
    %v324 = vsub.s32 2, %v323
    %v325 = vrot.slane %v54, %v324
    %v326 = vlaneseq
    %v327 = vshrl.u32 %v326, 7
    %v328 = vsub.s32 6, %v327
    %v329 = vrot.slane %v54, %v328
    %v334 = vlaneseq
    %v335 = vshrl.u32 %v334, 7
    %v336 = vsub.s32 2, %v335
    %v337 = vrot.slane %v317, %v336
    %v338 = vlaneseq
    %v339 = vshrl.u32 %v338, 7
    %v340 = vsub.s32 2, %v339
    %v341 = vrot.slane %v321, %v340
    %v342 = vlaneseq
    %v343 = vshrl.u32 %v342, 7
    %v344 = vsub.s32 2, %v343
    %v345 = vrot.slane %v325, %v344
    %v346 = vlaneseq
    %v347 = vshrl.u32 %v346, 7
    %v348 = vsub.s32 2, %v347
    %v349 = vrot.slane %v329, %v348
    %v350 = vmul.f32 %v312, %v337
    %v351 = vmul.f32 %v312, %v341
    %v352 = vmul.f32 %v312, %v345
    %v353 = vmul.f32 %v312, %v349
    %v354 = vadd.f32 %v306, %v350
    %v355 = vadd.f32 %v307, %v351
    %v356 = vadd.f32 %v308, %v352
    %v357 = vadd.f32 %v309, %v353
    %358 = vset.pattern.permute.xlu0 3
    %359 = vperm.xlu0 %358, %v55
    %v360 = vpop.permute.xlu0 %359
    %v362 = vlaneseq
    %v363 = vshrl.u32 %v362, 7
    %v364 = vsub.s32 3, %v363
    %v365 = vrot.slane %v51, %v364
    %v366 = vlaneseq
    %v367 = vshrl.u32 %v366, 7
    %v368 = vsub.s32 7, %v367
    %v369 = vrot.slane %v51, %v368
    %v370 = vlaneseq
    %v371 = vshrl.u32 %v370, 7
    %v372 = vsub.s32 3, %v371
    %v373 = vrot.slane %v52, %v372
    %v374 = vlaneseq
    %v375 = vshrl.u32 %v374, 7
    %v376 = vsub.s32 7, %v375
    %v377 = vrot.slane %v52, %v376
    %v382 = vlaneseq
    %v383 = vshrl.u32 %v382, 7
    %v384 = vsub.s32 3, %v383
    %v385 = vrot.slane %v365, %v384
    %v386 = vlaneseq
    %v387 = vshrl.u32 %v386, 7
    %v388 = vsub.s32 3, %v387
    %v389 = vrot.slane %v369, %v388
    %v390 = vlaneseq
    %v391 = vshrl.u32 %v390, 7
    %v392 = vsub.s32 3, %v391
    %v393 = vrot.slane %v373, %v392
    %v394 = vlaneseq
    %v395 = vshrl.u32 %v394, 7
    %v396 = vsub.s32 3, %v395
    %v397 = vrot.slane %v377, %v396
    %v398 = vmul.f32 %v360, %v385
    %v399 = vmul.f32 %v360, %v389
    %v400 = vmul.f32 %v360, %v393
    %v401 = vmul.f32 %v360, %v397
    %v402 = vadd.f32 %v354, %v398
    %v403 = vadd.f32 %v355, %v399
    %v404 = vadd.f32 %v356, %v400
    %v405 = vadd.f32 %v357, %v401
    %406 = vset.pattern.permute.xlu0 3
    %407 = vperm.xlu0 %406, %v56
    %v408 = vpop.permute.xlu0 %407
    %v410 = vlaneseq
    %v411 = vshrl.u32 %v410, 7
    %v412 = vsub.s32 3, %v411
    %v413 = vrot.slane %v53, %v412
    %v414 = vlaneseq
    %v415 = vshrl.u32 %v414, 7
    %v416 = vsub.s32 7, %v415
    %v417 = vrot.slane %v53, %v416
    %v418 = vlaneseq
    %v419 = vshrl.u32 %v418, 7
    %v420 = vsub.s32 3, %v419
    %v421 = vrot.slane %v54, %v420
    %v422 = vlaneseq
    %v423 = vshrl.u32 %v422, 7
    %v424 = vsub.s32 7, %v423
    %v425 = vrot.slane %v54, %v424
    %v430 = vlaneseq
    %v431 = vshrl.u32 %v430, 7
    %v432 = vsub.s32 3, %v431
    %v433 = vrot.slane %v413, %v432
    %v434 = vlaneseq
    %v435 = vshrl.u32 %v434, 7
    %v436 = vsub.s32 3, %v435
    %v437 = vrot.slane %v417, %v436
    %v438 = vlaneseq
    %v439 = vshrl.u32 %v438, 7
    %v440 = vsub.s32 3, %v439
    %v441 = vrot.slane %v421, %v440
    %v442 = vlaneseq
    %v443 = vshrl.u32 %v442, 7
    %v444 = vsub.s32 3, %v443
    %v445 = vrot.slane %v425, %v444
    %v446 = vmul.f32 %v408, %v433
    %v447 = vmul.f32 %v408, %v437
    %v448 = vmul.f32 %v408, %v441
    %v449 = vmul.f32 %v408, %v445
    %v450 = vadd.f32 %v402, %v446
    %v451 = vadd.f32 %v403, %v447
    %v452 = vadd.f32 %v404, %v448
    %v453 = vadd.f32 %v405, %v449
    %v454 = vxor.u32 %v450, 2147483648
    %v455 = vxor.u32 %v451, 2147483648
    %v456 = vxor.u32 %v452, 2147483648
    %v457 = vxor.u32 %v453, 2147483648
    %v458 = vmul.f32 %v454, 1.442695
    %v459 = vpow.pop %v458
    %v460 = vmul.f32 %v455, 1.442695
    %v461 = vpow.pop %v460
    %v462 = vmul.f32 %v456, 1.442695
    %v463 = vpow.pop %v462
    %v464 = vmul.f32 %v457, 1.442695
    %v465 = vpow.pop %v464
    %v466 = vadd.f32 %v459, 1.0
    %v467 = vadd.f32 %v461, 1.0
    %v468 = vadd.f32 %v463, 1.0
    %v469 = vadd.f32 %v465, 1.0
    %v470 = vrcp.pop %v466
    %v471 = vmul.f32 1.0, %v470
    %v472 = vrcp.pop %v467
    %v473 = vmul.f32 1.0, %v472
    %v474 = vrcp.pop %v468
    %v475 = vmul.f32 1.0, %v474
    %v476 = vrcp.pop %v469
    %v477 = vmul.f32 1.0, %v476
    %v478 = vld [vmem:[%s6] sm:$0xf]
    %480 = vset.pattern.permute.xlu0 0
    %481 = vperm.xlu0 %480, %v478
    %v482 = vpop.permute.xlu0 %481
    %485 = vset.pattern.permute.xlu0 0
    %486 = vperm.xlu0 %485, %v57
    %v487 = vpop.permute.xlu0 %486
    %v489 = vlaneseq
    %v490 = vshrl.u32 %v489, 7
    %v491 = vsub.s32 0, %v490
    %v492 = vrot.slane %v471, %v491
    %v493 = vlaneseq
    %v494 = vshrl.u32 %v493, 7
    %v495 = vsub.s32 0, %v494
    %v496 = vrot.slane %v473, %v495
    %v497 = vlaneseq
    %v498 = vshrl.u32 %v497, 7
    %v499 = vsub.s32 0, %v498
    %v500 = vrot.slane %v475, %v499
    %v501 = vlaneseq
    %v502 = vshrl.u32 %v501, 7
    %v503 = vsub.s32 0, %v502
    %v504 = vrot.slane %v477, %v503
    %v505 = vmul.f32 %v487, %v492
    %v506 = vmul.f32 %v487, %v496
    %v507 = vmul.f32 %v487, %v500
    %v508 = vmul.f32 %v487, %v504
    %v509 = vadd.f32 %v482, %v505
    %v510 = vadd.f32 %v482, %v506
    %v511 = vadd.f32 %v482, %v507
    %v512 = vadd.f32 %v482, %v508
    %513 = vset.pattern.permute.xlu0 1
    %514 = vperm.xlu0 %513, %v57
    %v515 = vpop.permute.xlu0 %514
    %v517 = vlaneseq
    %v518 = vshrl.u32 %v517, 7
    %v519 = vsub.s32 1, %v518
    %v520 = vrot.slane %v471, %v519
    %v521 = vlaneseq
    %v522 = vshrl.u32 %v521, 7
    %v523 = vsub.s32 1, %v522
    %v524 = vrot.slane %v473, %v523
    %v525 = vlaneseq
    %v526 = vshrl.u32 %v525, 7
    %v527 = vsub.s32 1, %v526
    %v528 = vrot.slane %v475, %v527
    %v529 = vlaneseq
    %v530 = vshrl.u32 %v529, 7
    %v531 = vsub.s32 1, %v530
    %v532 = vrot.slane %v477, %v531
    %v533 = vmul.f32 %v515, %v520
    %v534 = vmul.f32 %v515, %v524
    %v535 = vmul.f32 %v515, %v528
    %v536 = vmul.f32 %v515, %v532
    %v537 = vadd.f32 %v509, %v533
    %v538 = vadd.f32 %v510, %v534
    %v539 = vadd.f32 %v511, %v535
    %v540 = vadd.f32 %v512, %v536
    %541 = vset.pattern.permute.xlu0 2
    %542 = vperm.xlu0 %541, %v57
    %v543 = vpop.permute.xlu0 %542
    %v545 = vlaneseq
    %v546 = vshrl.u32 %v545, 7
    %v547 = vsub.s32 2, %v546
    %v548 = vrot.slane %v471, %v547
    %v549 = vlaneseq
    %v550 = vshrl.u32 %v549, 7
    %v551 = vsub.s32 2, %v550
    %v552 = vrot.slane %v473, %v551
    %v553 = vlaneseq
    %v554 = vshrl.u32 %v553, 7
    %v555 = vsub.s32 2, %v554
    %v556 = vrot.slane %v475, %v555
    %v557 = vlaneseq
    %v558 = vshrl.u32 %v557, 7
    %v559 = vsub.s32 2, %v558
    %v560 = vrot.slane %v477, %v559
    %v561 = vmul.f32 %v543, %v548
    %v562 = vmul.f32 %v543, %v552
    %v563 = vmul.f32 %v543, %v556
    %v564 = vmul.f32 %v543, %v560
    %v565 = vadd.f32 %v537, %v561
    %v566 = vadd.f32 %v538, %v562
    %v567 = vadd.f32 %v539, %v563
    %v568 = vadd.f32 %v540, %v564
    %569 = vset.pattern.permute.xlu0 3
    %570 = vperm.xlu0 %569, %v57
    %v571 = vpop.permute.xlu0 %570
    %v573 = vlaneseq
    %v574 = vshrl.u32 %v573, 7
    %v575 = vsub.s32 3, %v574
    %v576 = vrot.slane %v471, %v575
    %v577 = vlaneseq
    %v578 = vshrl.u32 %v577, 7
    %v579 = vsub.s32 3, %v578
    %v580 = vrot.slane %v473, %v579
    %v581 = vlaneseq
    %v582 = vshrl.u32 %v581, 7
    %v583 = vsub.s32 3, %v582
    %v584 = vrot.slane %v475, %v583
    %v585 = vlaneseq
    %v586 = vshrl.u32 %v585, 7
    %v587 = vsub.s32 3, %v586
    %v588 = vrot.slane %v477, %v587
    %v589 = vmul.f32 %v571, %v576
    %v590 = vmul.f32 %v571, %v580
    %v591 = vmul.f32 %v571, %v584
    %v592 = vmul.f32 %v571, %v588
    %v593 = vadd.f32 %v565, %v589
    %v594 = vadd.f32 %v566, %v590
    %v595 = vadd.f32 %v567, %v591
    %v596 = vadd.f32 %v568, %v592
    %v601 = vcombine.low %v593, %v594
    %v602 = vcombine.low %v595, %v596
    %v605 = vmul.f32 %v51, %v601
    %v606 = vmul.f32 %v52, %v602
    %607 = vst [vmem:[#allocation7] sm:$0xff] %v605
    %608 = vst [vmem:[#allocation7 + $0x8] sm:$0xff] %v606
    // Predicated region
    $region38: #{tpu_custom_call.1} parent=1 // pred_check
      _
    $region39: #{tpu_custom_call.1} parent=1 // pred_check_branch
      %610 = sbr.rel (0) target = $region41
    $region40: #{tpu_custom_call.1} parent=1 // pred_region
      %s612 = ssub.s32 256, 256
      %613 = vsyncadd [#allocation4], %s612
      %s615 = sshll.u32 [#allocation7], 4
      %s616 = int_to_ptr.vmem [resolvable:$true] %s615
      %618 = dma.vmem_to_hbm [thread:$0]  %s616, 256, %s7, [#allocation4]
    $region41: #{tpu_custom_call.1} parent=1 // pred_fallthru
      _
    // Predicated region
    $region42: #{tpu_custom_call.1} parent=1 // pred_check
      _
    $region43: #{tpu_custom_call.1} parent=1 // pred_check_branch
      %620 = sbr.rel (0) target = $region45
    $region44: #{tpu_custom_call.1} parent=1 // pred_region
      %621 = dma.done [#allocation4], 256
    $region45: #{tpu_custom_call.1} parent=1 // pred_fallthru
      _
    %622 = vsyncpa [#allocation3], 1
    %623 = vsyncpa [#allocation6], 1
    %624 = vsyncpa [#allocation4], 1

</llo_original>
